<compile_context>
chip_gen: v5e
topology: v5e:2x2
jax: 0.10.0
libtpu: 0.0.40
codegen_flags: <defaults>
</compile_context>

<pallas_src>
import functools

import jax
import jax.numpy as jnp
from jax.experimental import pallas as pl
from jax.experimental.pallas import tpu as pltpu

BN_EPS = 1e-5


def _pick_tile(total, target, multiple=8):
    """Largest divisor of `total` <= target that is a multiple of `multiple`
    (falls back to a single full-size tile)."""
    if total <= target:
        return total
    start = target - (target % multiple)
    for cand in range(start, 0, -multiple):
        if total % cand == 0:
            return cand
    return total


# ---------------------------------------------------------------------------
# Kernel A: farthest point sampling (sequential per batch element)
# ---------------------------------------------------------------------------
def _fps_kernel(xyz_ref, o_ref):
    # xyz_ref: [N, 3]   o_ref: [S, 3]
    xyz = xyz_ref[...]
    n = xyz.shape[0]
    s = o_ref.shape[0]
    row = jax.lax.broadcasted_iota(jnp.int32, (n, 1), 0)

    def body(i, carry):
        far, dist = carry                                   # int32 scalar, [N,1]
        sel = row == far
        c = jnp.sum(jnp.where(sel, xyz, 0.0), axis=0, keepdims=True)   # [1,3]
        o_ref[pl.ds(i, 1), :] = c                           # record centroid i
        d = jnp.sum((xyz - c) ** 2, axis=1, keepdims=True)  # [N,1]
        dist = jnp.minimum(dist, d)
        m = jnp.max(dist)
        far = jnp.min(jnp.where(dist == m, row, n))         # first argmax
        return far, dist

    jax.lax.fori_loop(
        0, s, body, (jnp.int32(0), jnp.full((n, 1), 1e10, jnp.float32)))


def farthest_point_sample(xyz, npoint):
    B, N, _ = xyz.shape
    return pl.pallas_call(
        _fps_kernel,
        out_shape=jax.ShapeDtypeStruct((B, npoint, 3), jnp.float32),
        grid=(B,),
        in_specs=[pl.BlockSpec((None, N, 3), lambda b: (b, 0, 0))],
        out_specs=pl.BlockSpec((None, npoint, 3), lambda b: (b, 0, 0)),
        compiler_params=pltpu.CompilerParams(dimension_semantics=("parallel",)),
    )(xyz.astype(jnp.float32))


# ---------------------------------------------------------------------------
# Kernel B: kNN + grouping (MXU distances, one-hot matmul gather)
# ---------------------------------------------------------------------------
def _knn_group_kernel(nxp_ref, xyzT_ref, pf_ref, o_ref, *, nsample):
    nxp = nxp_ref[...]            # [TS, Cin]  (cols 0..2 = sampled xyz, rest 0)
    xt = xyzT_ref[...]            # [3, N]
    pf = pf_ref[...]              # [N, Cin]   (cols 0..2 = xyz, rest = feats)
    ts = nxp.shape[0]
    n = xt.shape[1]

    nx = nxp[:, 0:3]              # [TS, 3]
    # squared pairwise distances (same formulation as PyTorch square_distance):
    #   ||t||^2 + ||s||^2 - 2 t.s   -- cross term on the MXU.
    tn = jnp.sum(nx * nx, axis=1, keepdims=True)                        # [TS,1]
    sn = jnp.sum(xt * xt, axis=0, keepdims=True)                        # [1,N]
    d = tn + sn - 2.0 * jnp.dot(nx, xt, preferred_element_type=jnp.float32)

    col = jax.lax.broadcasted_iota(jnp.int32, (ts, n), 1)
    outs = []
    dd = d
    for _ in range(nsample):                      # static unroll over neighbours
        min_d = jnp.min(dd, axis=1, keepdims=True)                      # [TS,1]
        sel_col = jnp.min(jnp.where(dd == min_d, col, n), axis=1, keepdims=True)
        sel = col == sel_col                      # exact one-hot per row
        # gather-by-matmul on the MXU: one-hot @ [xyz | feats]
        gathered = jnp.dot(sel.astype(jnp.float32), pf,
                           preferred_element_type=jnp.float32)          # [TS,Cin]
        outs.append(gathered - nxp)               # subtracts the xyz offset only
        dd = jnp.where(sel, jnp.inf, dd)
    # neighbour-major output [K, TS, Cin]: stack along a leading (untiled) axis,
    # so the store is a single layout-clean write (no lane-misaligned concat).
    o_ref[...] = jnp.stack(outs, axis=0).astype(o_ref.dtype)


def knn_group(xyz, points, new_xyz, nsample, *, block_s=128):
    """Returns grouped features in neighbour-major layout [B, K, S, 3+D]."""
    B, N, _ = xyz.shape
    S = new_xyz.shape[1]
    D = points.shape[-1]
    cin = D + 3
    # Tile over S; keep per-tile VMEM ([TS,N] slabs + resident [N,Cin]/[3,N])
    # comfortably under half of v7x's 64 MiB budget for realistic N.
    ts = _pick_tile(S, block_s)

    xyz_t = jnp.transpose(xyz, (0, 2, 1)).astype(jnp.float32)            # [B,3,N]
    pf = jnp.concatenate([xyz, points], axis=-1).astype(jnp.float32)      # [B,N,Cin]
    nxp = jnp.concatenate(
        [new_xyz.astype(jnp.float32), jnp.zeros((B, S, D), jnp.float32)],
        axis=-1)                                                          # [B,S,Cin]

    kernel = functools.partial(_knn_group_kernel, nsample=nsample)
    return pl.pallas_call(
        kernel,
        out_shape=jax.ShapeDtypeStruct((B, nsample, S, cin), jnp.float32),
        grid=(B, S // ts),
        in_specs=[
            pl.BlockSpec((None, ts, cin), lambda b, s: (b, s, 0)),
            pl.BlockSpec((None, 3, N), lambda b, s: (b, 0, 0)),     # resident
            pl.BlockSpec((None, N, cin), lambda b, s: (b, 0, 0)),   # resident
        ],
        out_specs=pl.BlockSpec((None, nsample, ts, cin),
                               lambda b, s: (b, 0, s, 0)),
        compiler_params=pltpu.CompilerParams(
            dimension_semantics=("parallel", "parallel")),
    )(nxp, xyz_t, pf)


# ---------------------------------------------------------------------------
# Kernel C: 1x1 conv (= row-wise linear) + streaming BN statistics
# ---------------------------------------------------------------------------
def _linear_stats_kernel(x_ref, wt_ref, b_ref, y_ref, stats_ref):
    @pl.when(pl.program_id(0) == 0)
    def _init():
        stats_ref[...] = jnp.zeros_like(stats_ref)

    y = jnp.dot(x_ref[...], wt_ref[...],
                preferred_element_type=jnp.float32) + b_ref[...]
    y_ref[...] = y.astype(y_ref.dtype)
    # streaming biased-BN statistics: sum and sum-of-squares per channel.
    stats_ref[0:1, :] += jnp.sum(y, axis=0, keepdims=True)
    stats_ref[1:2, :] += jnp.sum(y * y, axis=0, keepdims=True)


def linear_with_stats(x, w, b, *, block_rows=1024):
    """x: [M, Cin], w: [Cout, Cin] (PyTorch Conv2d 1x1 layout), b: [Cout].
    Returns (y [M, Cout], stats [2, Cout] = [sum(y), sum(y^2)])."""
    # TODO(synk): cast x / w operands to bfloat16 on v6e/v7x for HBM bandwidth;
    # kept f32 here for exact parity with the f32 reference check.
    M, cin = x.shape
    cout = w.shape[0]
    tm = _pick_tile(M, block_rows)
    return pl.pallas_call(
        _linear_stats_kernel,
        out_shape=(jax.ShapeDtypeStruct((M, cout), jnp.float32),
                   jax.ShapeDtypeStruct((2, cout), jnp.float32)),
        grid=(M // tm,),
        in_specs=[
            pl.BlockSpec((tm, cin), lambda i: (i, 0)),
            pl.BlockSpec((cin, cout), lambda i: (0, 0)),    # resident weights
            pl.BlockSpec((1, cout), lambda i: (0, 0)),      # resident bias
        ],
        out_specs=(pl.BlockSpec((tm, cout), lambda i: (i, 0)),
                   pl.BlockSpec((2, cout), lambda i: (0, 0))),  # resident accum
        compiler_params=pltpu.CompilerParams(
            dimension_semantics=("arbitrary",)),  # stats accumulate across tiles
    )(x.astype(jnp.float32), jnp.transpose(w).astype(jnp.float32),
      b.reshape(1, cout).astype(jnp.float32))


# ---------------------------------------------------------------------------
# Kernel D: folded BN (scale/shift) + ReLU               (intermediate layers)
# Kernel D': folded BN + ReLU + max-pool over neighbours (last layer)
# ---------------------------------------------------------------------------
def _scale_shift_relu_kernel(y_ref, sc_ref, sh_ref, o_ref):
    o_ref[...] = jnp.maximum(y_ref[...] * sc_ref[...] + sh_ref[...], 0.0)


def scale_shift_relu(y, scale, shift, *, block_rows=1024):
    M, c = y.shape
    tm = _pick_tile(M, block_rows)
    return pl.pallas_call(
        _scale_shift_relu_kernel,
        out_shape=jax.ShapeDtypeStruct((M, c), jnp.float32),
        grid=(M // tm,),
        in_specs=[pl.BlockSpec((tm, c), lambda i: (i, 0)),
                  pl.BlockSpec((1, c), lambda i: (0, 0)),
                  pl.BlockSpec((1, c), lambda i: (0, 0))],
        out_specs=pl.BlockSpec((tm, c), lambda i: (i, 0)),
        compiler_params=pltpu.CompilerParams(dimension_semantics=("parallel",)),
    )(y, scale.reshape(1, c).astype(jnp.float32),
      shift.reshape(1, c).astype(jnp.float32))


def _scale_shift_relu_maxpool_kernel(y_ref, sc_ref, sh_ref, o_ref):
    act = jnp.maximum(y_ref[...] * sc_ref[...] + sh_ref[...], 0.0)  # [K,TS,C]
    o_ref[...] = jnp.max(act, axis=0)                                # [TS,C]


def scale_shift_relu_maxpool(y_bksc, scale, shift, *, block_s=128):
    """y_bksc: [B, K, S, C] (neighbour-major). Returns pooled [B, S, C]."""
    B, K, S, c = y_bksc.shape
    ts = _pick_tile(S, block_s)
    return pl.pallas_call(
        _scale_shift_relu_maxpool_kernel,
        out_shape=jax.ShapeDtypeStruct((B, S, c), jnp.float32),
        grid=(B, S // ts),
        in_specs=[pl.BlockSpec((None, K, ts, c), lambda b, s: (b, 0, s, 0)),
                  pl.BlockSpec((1, 1, c), lambda b, s: (0, 0, 0)),
                  pl.BlockSpec((1, 1, c), lambda b, s: (0, 0, 0))],
        out_specs=pl.BlockSpec((None, ts, c), lambda b, s: (b, s, 0)),
        compiler_params=pltpu.CompilerParams(
            dimension_semantics=("parallel", "parallel")),
    )(y_bksc, scale.reshape(1, 1, c).astype(jnp.float32),
      shift.reshape(1, 1, c).astype(jnp.float32))


# ---------------------------------------------------------------------------
# TransitionDown forward
# ---------------------------------------------------------------------------
def transition_down(xyz, points, params, *, npoint, nsample,
                    block_rows=1024, block_s=128):
    """xyz: [B,N,3], points: [B,N,D].  Returns (new_xyz [B,npoint,3],
    pooled features [B,npoint,mlp[-1]])."""
    B, N, _ = xyz.shape
    D = points.shape[-1]
    cin = D + 3

    new_xyz = farthest_point_sample(xyz, npoint)                   # [B,S,3]
    grouped = knn_group(xyz, points, new_xyz, nsample,
                        block_s=block_s)                           # [B,K,S,Cin]

    M = B * nsample * npoint
    x = grouped.reshape(M, cin)                                    # rows = (b,k,s)
    n_layers = len(params["w"])
    pooled = None
    for li in range(n_layers):
        w, b = params["w"][li], params["b"][li]
        g, be = params["g"][li], params["be"][li]
        cout = w.shape[0]
        y, stats = linear_with_stats(x, w, b, block_rows=block_rows)
        # fold BN (training-mode batch stats) into one scale/shift (tiny glue)
        mean = stats[0] / M
        var = stats[1] / M - mean * mean
        scale = g * jax.lax.rsqrt(var + BN_EPS)
        shift = be - mean * scale
        if li + 1 < n_layers:
            x = scale_shift_relu(y, scale, shift, block_rows=block_rows)
        else:
            pooled = scale_shift_relu_maxpool(
                y.reshape(B, nsample, npoint, cout), scale, shift,
                block_s=block_s)                                   # [B,S,Cout]
    return new_xyz, pooled


# ---------------------------------------------------------------------------
# Pure-JAX reference (for correctness check)
# ---------------------------------------------------------------------------
def _reference(xyz, points, params, npoint, nsample):
    B, N, _ = xyz.shape

    def fps_one(xb):
        def body(i, carry):
            far, dist, cent = carry
            cent = cent.at[i].set(far)
            c = xb[far]
            d = jnp.sum((xb - c) ** 2, axis=-1)
            dist = jnp.minimum(dist, d)
            return jnp.argmax(dist).astype(jnp.int32), dist, cent
        carry = (jnp.int32(0), jnp.full((N,), 1e10, jnp.float32),
                 jnp.zeros((npoint,), jnp.int32))
        return jax.lax.fori_loop(0, npoint, body, carry)[2]

    fps_idx = jax.vmap(fps_one)(xyz)                                  # [B,S]
    new_xyz = jax.vmap(lambda x, i: x[i])(xyz, fps_idx)               # [B,S,3]

    d = (jnp.sum(new_xyz ** 2, -1)[:, :, None]
         + jnp.sum(xyz ** 2, -1)[:, None, :]
         - 2.0 * jnp.einsum("bsc,bnc->bsn", new_xyz, xyz))            # [B,S,N]
    _, idx = jax.lax.top_k(-d, nsample)                               # [B,S,K]

    g_xyz = jax.vmap(lambda x, i: x[i])(xyz, idx)                     # [B,S,K,3]
    g_pts = jax.vmap(lambda p, i: p[i])(points, idx)                  # [B,S,K,D]
    g = jnp.concatenate([g_xyz - new_xyz[:, :, None, :], g_pts], -1)

    x = g.reshape(B * npoint * nsample, -1)
    for li in range(len(params["w"])):
        w, b = params["w"][li], params["b"][li]
        gm, bt = params["g"][li], params["be"][li]
        y = x @ w.T + b
        mean = jnp.mean(y, axis=0)
        var = jnp.mean((y - mean) ** 2, axis=0)
        x = jnp.maximum((y - mean) * jax.lax.rsqrt(var + BN_EPS) * gm + bt, 0.0)
    out = jnp.max(x.reshape(B, npoint, nsample, -1), axis=2)
    return new_xyz, out


if __name__ == "__main__":
    # Small shapes consistent with the module:
    #   TransitionDown(k=16, nneighbor=8, channels=[D+3, 32, 32]) with D=16.
    B, N, D = 2, 64, 16
    npoint, nsample = 16, 8
    mlp = (32, 32)

    key = jax.random.PRNGKey(0)
    ks = jax.random.split(key, 2 + 4 * len(mlp))
    xyz = jax.random.normal(ks[0], (B, N, 3), jnp.float32)
    points = jax.random.normal(ks[1], (B, N, D), jnp.float32)

    params = {"w": [], "b": [], "g": [], "be": []}
    last = D + 3
    for li, cout in enumerate(mlp):
        kw, kb, kg, kbe = ks[2 + 4 * li: 6 + 4 * li]
        params["w"].append(0.1 * jax.random.normal(kw, (cout, last), jnp.float32))
        params["b"].append(0.1 * jax.random.normal(kb, (cout,), jnp.float32))
        params["g"].append(1.0 + 0.1 * jax.random.normal(kg, (cout,), jnp.float32))
        params["be"].append(0.1 * jax.random.normal(kbe, (cout,), jnp.float32))
        last = cout

    # block_rows=128 exercises the multi-tile streaming-BN-stats path
    # (M = B*npoint*nsample = 256 rows -> 2 grid steps).
    new_xyz, out = transition_down(xyz, points, params,
                                   npoint=npoint, nsample=nsample,
                                   block_rows=128)
    new_xyz = jax.block_until_ready(new_xyz)
    out = jax.block_until_ready(out)
    assert new_xyz.shape == (B, npoint, 3), new_xyz.shape
    assert out.shape == (B, npoint, mlp[-1]), out.shape

    with jax.default_matmul_precision("float32"):
        ref_xyz, ref_out = _reference(xyz, points, params, npoint, nsample)
    ref_xyz = jax.block_until_ready(ref_xyz)
    ref_out = jax.block_until_ready(ref_out)

    err_xyz = float(jnp.max(jnp.abs(new_xyz - ref_xyz)))
    err_out = float(jnp.max(jnp.abs(out - ref_out)))
    assert err_xyz < 1e-4, f"new_xyz max abs error too large: {err_xyz}"
    assert err_out < 5e-2, f"pooled features max abs error too large: {err_out}"

    print("KERNEL_OK")
</pallas_src>

<mosaic_0001>
module attributes {stable_mosaic.version = 11 : i64} {
  func.func @_fps_kernel(%arg0: i32, %arg1: memref<1x64x3xf32, #tpu.memory_space<vmem>>, %arg2: memref<1x16x3xf32, #tpu.memory_space<vmem>>) attributes {dimension_semantics = [#tpu.dimension_semantics<parallel>], iteration_bounds = array<i64: 2>, scalar_prefetch = 0 : i64, scratch_operands = 0 : i64, tpu.core_type = #tpu.core_type<tc>, window_params = [{transform_indices = @transform_0, window_bounds = array<i64: 1, 64, 3>}, {transform_indices = @transform_1, window_bounds = array<i64: 1, 16, 3>}]} {
    %c0 = arith.constant 0 : index
    %c0_0 = arith.constant 0 : index
    %c0_1 = arith.constant 0 : index
    %0 = vector.load %arg1[%c0, %c0_0, %c0_1] : memref<1x64x3xf32, #tpu.memory_space<vmem>>, vector<1x64x3xf32>
    %1 = vector.shape_cast %0 : vector<1x64x3xf32> to vector<64x3xf32>
    %2 = tpu.iota {dimensions = array<i32: 0>} : vector<64x1xi32>
    %cst = arith.constant 1.000000e+10 : f32
    %3 = vector.broadcast %cst : f32 to vector<64x1xf32>
    %c0_i32 = arith.constant 0 : i32
    %c0_i32_2 = arith.constant 0 : i32
    %c16_i32 = arith.constant 16 : i32
    %4 = arith.addi %c0_i32_2, %c16_i32 : i32
    %c1_i32 = arith.constant 1 : i32
    %5:2 = scf.for %arg3 = %c0_i32_2 to %4 step %c1_i32 iter_args(%arg4 = %c0_i32, %arg5 = %3) -> (i32, vector<64x1xf32>)  : i32 {
      %6 = vector.broadcast %arg4 : i32 to vector<64x1xi32>
      %7 = arith.cmpi eq, %2, %6 : vector<64x1xi32>
      %cst_4 = arith.constant 0.000000e+00 : f32
      %8 = vector.shape_cast %7 : vector<64x1xi1> to vector<64x1xi1>
      %9 = vector.broadcast %8 : vector<64x1xi1> to vector<64x3xi1>
      %10 = vector.broadcast %cst_4 : f32 to vector<64x3xf32>
      %11 = arith.select %9, %1, %10 : vector<64x3xi1>, vector<64x3xf32>
      %cst_5 = arith.constant dense<0.000000e+00> : vector<3xf32>
      %12 = vector.multi_reduction <add>, %11, %cst_5 [0] : vector<64x3xf32> to vector<3xf32>
      %13 = vector.shape_cast %12 : vector<3xf32> to vector<1x3xf32>
      %c0_6 = arith.constant 0 : index
      %14 = arith.index_cast %arg3 : i32 to index
      %c0_7 = arith.constant 0 : index
      %15 = vector.load %arg2[%c0_6, %14, %c0_7] : memref<1x16x3xf32, #tpu.memory_space<vmem>>, vector<1x1x3xf32>
      %16 = vector.shape_cast %15 : vector<1x1x3xf32> to vector<1x3xf32>
      %17 = vector.shape_cast %13 : vector<1x3xf32> to vector<1x1x3xf32>
      tpu.vector_store %arg2[%c0_6, %14, %c0_7], %17 {strides = array<i32>} : memref<1x16x3xf32, #tpu.memory_space<vmem>>, vector<1x1x3xf32>,
      %18 = vector.broadcast %13 : vector<1x3xf32> to vector<64x3xf32>
      %19 = arith.subf %1, %18 : vector<64x3xf32>
      %20 = arith.mulf %19, %19 : vector<64x3xf32>
      %cst_8 = arith.constant dense<0.000000e+00> : vector<64xf32>
      %21 = vector.multi_reduction <add>, %20, %cst_8 [1] : vector<64x3xf32> to vector<64xf32>
      %22 = vector.shape_cast %21 : vector<64xf32> to vector<64x1xf32>
      %23 = arith.minimumf %arg5, %22 : vector<64x1xf32>
      %24 = vector.shape_cast %23 : vector<64x1xf32> to vector<1x64x1xf32>
      %cst_9 = arith.constant dense<0xFF800000> : vector<1xf32>
      %25 = vector.multi_reduction <maximumf>, %24, %cst_9 [1, 2] : vector<1x64x1xf32> to vector<1xf32>
      %26 = vector.shape_cast %25 : vector<1xf32> to vector<1x1x1xf32>
      %27 = vector.extract %26[0, 0, 0] : f32 from vector<1x1x1xf32>
      %28 = vector.broadcast %27 : f32 to vector<64x1xf32>
      %29 = arith.cmpf oeq, %23, %28 : vector<64x1xf32>
      %c64_i32 = arith.constant 64 : i32
      %30 = vector.broadcast %c64_i32 : i32 to vector<64x1xi32>
      %31 = arith.select %29, %2, %30 : vector<64x1xi1>, vector<64x1xi32>
      %32 = vector.shape_cast %31 : vector<64x1xi32> to vector<1x64x1xi32>
      %cst_10 = arith.constant dense<2147483647> : vector<1xi32>
      %33 = vector.multi_reduction <minsi>, %32, %cst_10 [1, 2] : vector<1x64x1xi32> to vector<1xi32>
      %34 = vector.shape_cast %33 : vector<1xi32> to vector<1x1x1xi32>
      %35 = vector.extract %34[0, 0, 0] : i32 from vector<1x1x1xi32>
      scf.yield %35, %23 : i32, vector<64x1xf32>
    }
    %c16_i32_3 = arith.constant 16 : i32
    return
  }
  func.func @transform_0(%arg0: i32) -> (i32, i32, i32) {
    %c0_i32 = arith.constant 0 : i32
    %c0_i32_0 = arith.constant 0 : i32
    %c0_i32_1 = arith.constant 0 : i32
    return %arg0, %c0_i32, %c0_i32_0 : i32, i32, i32
  }
  func.func @transform_1(%arg0: i32) -> (i32, i32, i32) {
    %c0_i32 = arith.constant 0 : i32
    %c0_i32_0 = arith.constant 0 : i32
    %c0_i32_1 = arith.constant 0 : i32
    return %arg0, %c0_i32, %c0_i32_0 : i32, i32, i32
  }
}

</mosaic_0001>

<llo_original>
// kernel: tpu_custom_call.1
$region0: #{tpu_custom_call.1}
  #allocation0 [shape = 'u32[]', space=smem, size = 0x4, offset = 0x4, fixed_abs, tag = 'smem constant byte address 0x4 - core index']
  #allocation1 [shape = 'u32[72,128]{1,0:T(1,128)}', space=vmem, size = 0x9000, scoped, tag = 'internal scratch']
  %s0 = inlined_call_operand.vmem [shape: f32[2,64,3], index: 0, kind: input, shape index: {}]
  %s1 = inlined_call_operand.vmem [shape: f32[2,16,3], index: 1, kind: output, shape index: {}]
  %s2 = sld [smem:[#allocation0]]
  $region44: #{tpu_custom_call.1} parent=0
    _
  %s4 = ssub.s32 1, %s2
  %s5 = scalar_select 0, %s4, %s2
  loop: start=0, step=1, limit=4
  $region2: #{tpu_custom_call.1} parent=0 // loop_pre_header
    _
  $region3: #{tpu_custom_call.1} parent=0 // loop_header
    %s7 = sphi 0, %s11
    %p8 = scmp.ge.s32.totalorder %s7, 4
    %s17 = sphi 0, %s19
    %s20 = sphi 0, %s17
    %s21 = sphi 0, %s20
    %s37 = sphi 0, %s21
    %s43 = sphi 0, %s45
    %s46 = sphi 0, %s43
    %s47 = sphi 0, %s46
    %s63 = sphi 0, %s47
  $region4: #{tpu_custom_call.1} parent=0 // loop_header_branch
    %10 = sbr.rel (%p8) target = $region8
  $region5: #{tpu_custom_call.1} parent=0 // loop_body
    %s12 = ssub.s32 %s7, 1
    %s13 = ssub.s32 %s7, 2
    %s14 = sadd.s32 %s7, 1
    %s15 = ssub.s32 %s7, %s14
    %p16 = scmp.eq.s32.totalorder %s15, 0
    %s18 = sadd.s32 %s17, 1
    %s19 = scalar_select %p16, %s17, %s18
    %p22 = pneg %p16
    %p23 = scmp.eq.s32.totalorder %s7, 1
    %p24 = por %p22, %p23
    %p25 = scmp.ne.s32.totalorder %s17, %s20
    %p26 = scmp.eq.s32.totalorder %s7, 0
    %p27 = por %p25, %p26
    %p28 = scmp.ne.s32.totalorder %s17, %s20
    %p29 = scmp.eq.s32.totalorder %s12, 1
    %p30 = por %p28, %p29
    %p31 = scmp.ne.s32.totalorder %s20, %s21
    %p32 = scmp.eq.s32.totalorder %s12, 0
    %p33 = por %p31, %p32
    %p34 = scmp.ne.s32.totalorder %s20, %s21
    %p35 = scmp.eq.s32.totalorder %s13, 1
    %p36 = por %p34, %p35
    %p38 = scmp.ne.s32.totalorder %s21, %s37
    %p39 = scmp.eq.s32.totalorder %s13, 0
    %p40 = por %p38, %p39
    %s41 = ssub.s32 %s7, %s14
    %p42 = scmp.eq.s32.totalorder %s41, 0
    %s44 = sadd.s32 %s43, 1
    %s45 = scalar_select %p42, %s43, %s44
    %p48 = pneg %p42
    %p49 = scmp.eq.s32.totalorder %s7, 1
    %p50 = por %p48, %p49
    %p51 = scmp.ne.s32.totalorder %s43, %s46
    %p52 = scmp.eq.s32.totalorder %s7, 0
    %p53 = por %p51, %p52
    %p54 = scmp.ne.s32.totalorder %s43, %s46
    %p55 = scmp.eq.s32.totalorder %s12, 1
    %p56 = por %p54, %p55
    %p57 = scmp.ne.s32.totalorder %s46, %s47
    %p58 = scmp.eq.s32.totalorder %s12, 0
    %p59 = por %p57, %p58
    %p60 = scmp.ne.s32.totalorder %s46, %s47
    %p61 = scmp.eq.s32.totalorder %s13, 1
    %p62 = por %p60, %p61
    %p64 = scmp.ne.s32.totalorder %s47, %s63
    %p65 = scmp.eq.s32.totalorder %s13, 0
    %p66 = por %p64, %p65
    %p67 = scmp.le.s32.totalorder 1, %s7
    %p68 = scmp.lt.s32.totalorder %s7, 3
    %p69 = pnand %p67, %p68
    %p70 = pneg %p69
    // Predicated region
    $region9: #{tpu_custom_call.1} parent=5 // pred_check
      _
    $region10: #{tpu_custom_call.1} parent=5 // pred_check_branch
      %72 = sbr.rel (%p69) target = $region12
    $region11: #{tpu_custom_call.1} parent=5 // pred_region
      %s73 = ssub.s32 %s7, 1
    $region12: #{tpu_custom_call.1} parent=5 // pred_fallthru
      _
    %p74 = scmp.lt.s32.totalorder %s7, 2
    // Predicated region
    $region13: #{tpu_custom_call.1} parent=5 // pred_check
      %p75 = pneg %p74
    $region14: #{tpu_custom_call.1} parent=5 // pred_check_branch
      %77 = sbr.rel (%p75) target = $region16
    $region15: #{tpu_custom_call.1} parent=5 // pred_region
      // Predicated region
      $region17: #{tpu_custom_call.1} parent=15 // pred_check
        %p78 = pneg %p27
      $region18: #{tpu_custom_call.1} parent=15 // pred_check_branch
        %80 = sbr.rel (%p78) target = $region20
      $region19: #{tpu_custom_call.1} parent=15 // pred_region
        %p81 = scmp.lt.s32.totalorder %s7, 1
        %s82 = scalar_select %p81, %s7, 1
        %s83 = smul.addr %s82, 8
        %s84 = smul.addr %s83, 8
        %s85 = scalar_lea.vmem %s0, %s84
      $region20: #{tpu_custom_call.1} parent=15 // pred_fallthru
        _
    $region16: #{tpu_custom_call.1} parent=5 // pred_fallthru
      _
    %p86 = scmp.le.s32.totalorder 1, %s7
    %p87 = scmp.lt.s32.totalorder %s7, 3
    %p88 = pnand %p86, %p87
    %p89 = pneg %p88
    // Predicated region
    $region21: #{tpu_custom_call.1} parent=5 // pred_check
      _
    $region22: #{tpu_custom_call.1} parent=5 // pred_check_branch
      %91 = sbr.rel (%p88) target = $region24
    $region23: #{tpu_custom_call.1} parent=5 // pred_region
      %s92 = ssub.s32 %s7, 1
      %p93 = scmp.lt.s32.totalorder %s12, 1
      %s94 = scalar_select %p93, %s12, 1
      %s95 = smul.addr %s94, 8
      %s96 = smul.addr %s95, 8
      %s97 = scalar_lea.vmem %s0, %s96
      %p98 = pneg %p33
      %p99 = pneg %p30
      %p100 = pneg %p59
      %p101 = pneg %p56
      %p102 = scmp.lt.s32.totalorder %s12, 1
      %s103 = scalar_select %p102, %s12, 1
      %s104 = smul.addr %s103, 2
      %s105 = smul.addr %s104, 8
      %s106 = scalar_lea.vmem %s1, %s105
      %p107 = scmp.lt.s32.totalorder %s12, 1
      %s108 = scalar_select %p107, %s12, 1
      %s109 = smul.addr %s108, 8
      %s110 = smul.addr %s109, 8
      %s111 = scalar_lea.vmem %s0, %s110
      %p112 = scmp.lt.s32.totalorder %s12, 1
      %s113 = scalar_select %p112, %s12, 1
      %s114 = smul.addr %s113, 2
      %s115 = smul.addr %s114, 8
      %s116 = scalar_lea.vmem %s1, %s115
      %v117 = vld [vmem:[%s111] sm:$0xff]
      %v118 = vld [vmem:[%s111 + $0x8] sm:$0xff]
      %v119 = vld [vmem:[%s111 + $0x10] sm:$0xff]
      %v120 = vld [vmem:[%s111 + $0x18] sm:$0xff]
      %v121 = vld [vmem:[%s111 + $0x20] sm:$0xff]
      %v122 = vld [vmem:[%s111 + $0x28] sm:$0xff]
      %v123 = vld [vmem:[%s111 + $0x30] sm:$0xff]
      %v124 = vld [vmem:[%s111 + $0x38] sm:$0xff]
      %v125 = vlaneseq
      %v126 = vshrl.u32 %v125, 7
      %v127 = vadd.s32 %v126, 8
      %v128 = vadd.s32 %v126, 16
      %v129 = vadd.s32 %v126, 24
      %v130 = vadd.s32 %v126, 32
      %v131 = vadd.s32 %v126, 40
      %v132 = vadd.s32 %v126, 48
      %v133 = vadd.s32 %v126, 56
      loop: start=0, step=1, limit=16
      $region25: #{tpu_custom_call.1} parent=23 // loop_pre_header
        _
      $region26: #{tpu_custom_call.1} parent=23 // loop_header
        %s135 = sphi 0, %s139
        %p136 = scmp.ge.s32.totalorder %s135, 16
        %s140 = sphi 0, %s309
        %v141 = vphi 1e+10, %v247
        %v142 = vphi 1e+10, %v248
        %v143 = vphi 1e+10, %v249
        %v144 = vphi 1e+10, %v250
        %v145 = vphi 1e+10, %v251
        %v146 = vphi 1e+10, %v252
        %v147 = vphi 1e+10, %v253
        %v148 = vphi 1e+10, %v254
      $region27: #{tpu_custom_call.1} parent=23 // loop_header_branch
        %138 = sbr.rel (%p136) target = $region31
      $region28: #{tpu_custom_call.1} parent=23 // loop_body
        %v149 = vstv %s140
        %vm150 = vcmp.eq.s32.totalorder %v126, %v149
        %vm151 = vcmp.eq.s32.totalorder %v127, %v149
        %vm152 = vcmp.eq.s32.totalorder %v128, %v149
        %vm153 = vcmp.eq.s32.totalorder %v129, %v149
        %vm154 = vcmp.eq.s32.totalorder %v130, %v149
        %vm155 = vcmp.eq.s32.totalorder %v131, %v149
        %vm156 = vcmp.eq.s32.totalorder %v132, %v149
        %vm157 = vcmp.eq.s32.totalorder %v133, %v149
        %v158 = vsel %vm150, 1, 0
        %v159 = vsel %vm151, 1, 0
        %v160 = vsel %vm152, 1, 0
        %v161 = vsel %vm153, 1, 0
        %v162 = vsel %vm154, 1, 0
        %v163 = vsel %vm155, 1, 0
        %v164 = vsel %vm156, 1, 0
        %v165 = vsel %vm157, 1, 0
        %vm166 = vcmp.eq.s32.totalorder %v158, 1
        %vm167 = vcmp.eq.s32.totalorder %v159, 1
        %vm168 = vcmp.eq.s32.totalorder %v160, 1
        %vm169 = vcmp.eq.s32.totalorder %v161, 1
        %vm170 = vcmp.eq.s32.totalorder %v162, 1
        %vm171 = vcmp.eq.s32.totalorder %v163, 1
        %vm172 = vcmp.eq.s32.totalorder %v164, 1
        %vm173 = vcmp.eq.s32.totalorder %v165, 1
        %v174 = vsel %vm166, %v117, 0.0
        %v175 = vsel %vm167, %v118, 0.0
        %v176 = vsel %vm168, %v119, 0.0
        %v177 = vsel %vm169, %v120, 0.0
        %v178 = vsel %vm170, %v121, 0.0
        %v179 = vsel %vm171, %v122, 0.0
        %v180 = vsel %vm172, %v123, 0.0
        %v181 = vsel %vm173, %v124, 0.0
        %vm182 = vcmask 23552
        %v183 = vsel %vm182, %v174, 0.0
        %v184 = vsel %vm182, %v175, 0.0
        %v185 = vadd.f32 %v183, %v184
        %v186 = vsel %vm182, %v176, 0.0
        %v187 = vadd.f32 %v185, %v186
        %v188 = vsel %vm182, %v177, 0.0
        %v189 = vadd.f32 %v187, %v188
        %v190 = vsel %vm182, %v178, 0.0
        %v191 = vadd.f32 %v189, %v190
        %v192 = vsel %vm182, %v179, 0.0
        %v193 = vadd.f32 %v191, %v192
        %v194 = vsel %vm182, %v180, 0.0
        %v195 = vadd.f32 %v193, %v194
        %v196 = vsel %vm182, %v181, 0.0
        %v197 = vadd.f32 %v195, %v196
        %v198 = vrot.slane %v197, 4
        %v199 = vadd.f32 %v197, %v198
        %v200 = vrot.slane %v199, 2
        %v201 = vadd.f32 %v199, %v200
        %v202 = vrot.slane %v201, 1
        %v203 = vadd.f32 %v201, %v202
        %s204 = scalar_lea.vmem %s116, %s135
        %vm205 = vcmask 16384
        %206 = vst.msk [vmem:[%s204] sm:$0x1] %vm205, %v203
        %v207 = vsub.f32 %v117, %v203
        %v208 = vsub.f32 %v118, %v203
        %v209 = vsub.f32 %v119, %v203
        %v210 = vsub.f32 %v120, %v203
        %v211 = vsub.f32 %v121, %v203
        %v212 = vsub.f32 %v122, %v203
        %v213 = vsub.f32 %v123, %v203
        %v214 = vsub.f32 %v124, %v203
        %v215 = vmul.f32 %v207, %v207
        %v216 = vmul.f32 %v208, %v208
        %v217 = vmul.f32 %v209, %v209
        %v218 = vmul.f32 %v210, %v210
        %v219 = vmul.f32 %v211, %v211
        %v220 = vmul.f32 %v212, %v212
        %v221 = vmul.f32 %v213, %v213
        %v222 = vmul.f32 %v214, %v214
        %v223 = vsel %vm182, %v215, 0.0
        %224 = vadd.xlane.f32.xlu0 %v223
        %v225 = vpop.xlane.xlu0 %224
        %v226 = vsel %vm182, %v216, 0.0
        %227 = vadd.xlane.f32.xlu0 %v226
        %v228 = vpop.xlane.xlu0 %227
        %v229 = vsel %vm182, %v217, 0.0
        %230 = vadd.xlane.f32.xlu0 %v229
        %v231 = vpop.xlane.xlu0 %230
        %v232 = vsel %vm182, %v218, 0.0
        %233 = vadd.xlane.f32.xlu0 %v232
        %v234 = vpop.xlane.xlu0 %233
        %v235 = vsel %vm182, %v219, 0.0
        %236 = vadd.xlane.f32.xlu0 %v235
        %v237 = vpop.xlane.xlu0 %236
        %v238 = vsel %vm182, %v220, 0.0
        %239 = vadd.xlane.f32.xlu0 %v238
        %v240 = vpop.xlane.xlu0 %239
        %v241 = vsel %vm182, %v221, 0.0
        %242 = vadd.xlane.f32.xlu0 %v241
        %v243 = vpop.xlane.xlu0 %242
        %v244 = vsel %vm182, %v222, 0.0
        %245 = vadd.xlane.f32.xlu0 %v244
        %v246 = vpop.xlane.xlu0 %245
        %v247 = vmin.f32 %v141, %v225
        %v248 = vmin.f32 %v142, %v228
        %v249 = vmin.f32 %v143, %v231
        %v250 = vmin.f32 %v144, %v234
        %v251 = vmin.f32 %v145, %v237
        %v252 = vmin.f32 %v146, %v240
        %v253 = vmin.f32 %v147, %v243
        %v254 = vmin.f32 %v148, %v246
        %v255 = vmax.f32 %v247, %v251
        %v256 = vmax.f32 %v248, %v252
        %v257 = vmax.f32 %v249, %v253
        %v258 = vmax.f32 %v250, %v254
        %v259 = vmax.f32 %v255, %v256
        %v260 = vmax.f32 %v257, %v258
        %v261 = vmax.f32 %v259, %v260
        %v262 = vrot.slane %v261, 4
        %v263 = vmax.f32 %v261, %v262
        %v264 = vrot.slane %v263, 2
        %v265 = vmax.f32 %v263, %v264
        %v266 = vrot.slane %v265, 1
        %v267 = vmax.f32 %v265, %v266
        %s268 = vtos %v267
        %v269 = vstv %s268
        %vm270 = vcmp.eq.f32.partialorder %v247, %v269
        %vm271 = vcmp.eq.f32.partialorder %v248, %v269
        %vm272 = vcmp.eq.f32.partialorder %v249, %v269
        %vm273 = vcmp.eq.f32.partialorder %v250, %v269
        %vm274 = vcmp.eq.f32.partialorder %v251, %v269
        %vm275 = vcmp.eq.f32.partialorder %v252, %v269
        %vm276 = vcmp.eq.f32.partialorder %v253, %v269
        %vm277 = vcmp.eq.f32.partialorder %v254, %v269
        %v278 = vsel %vm270, %v126, 64
        %v279 = vsel %vm271, %v127, 64
        %v280 = vsel %vm272, %v128, 64
        %v281 = vsel %vm273, %v129, 64
        %v282 = vsel %vm274, %v130, 64
        %v283 = vsel %vm275, %v131, 64
        %v284 = vsel %vm276, %v132, 64
        %v285 = vsel %vm277, %v133, 64
        %vm286 = vcmp.lt.s32.totalorder %v278, %v282
        %v287 = vsel %vm286, %v278, %v282
        %vm288 = vcmp.lt.s32.totalorder %v279, %v283
        %v289 = vsel %vm288, %v279, %v283
        %vm290 = vcmp.lt.s32.totalorder %v280, %v284
        %v291 = vsel %vm290, %v280, %v284
        %vm292 = vcmp.lt.s32.totalorder %v281, %v285
        %v293 = vsel %vm292, %v281, %v285
        %vm294 = vcmp.lt.s32.totalorder %v287, %v289
        %v295 = vsel %vm294, %v287, %v289
        %vm296 = vcmp.lt.s32.totalorder %v291, %v293
        %v297 = vsel %vm296, %v291, %v293
        %vm298 = vcmp.lt.s32.totalorder %v295, %v297
        %v299 = vsel %vm298, %v295, %v297
        %v300 = vrot.slane %v299, 4
        %vm301 = vcmp.lt.s32.totalorder %v299, %v300
        %v302 = vsel %vm301, %v299, %v300
        %v303 = vrot.slane %v302, 2
        %vm304 = vcmp.lt.s32.totalorder %v302, %v303
        %v305 = vsel %vm304, %v302, %v303
        %v306 = vrot.slane %v305, 1
        %vm307 = vcmp.lt.s32.totalorder %v305, %v306
        %v308 = vsel %vm307, %v305, %v306
        %s309 = vtos %v308
      $region29: #{tpu_custom_call.1} parent=23 // loop_footer
        %s139 = sadd.s32 1, %s135
      $region30: #{tpu_custom_call.1} parent=23 // loop_footer_branch
        %134 = sbr.rel target = $region26
      $region31: #{tpu_custom_call.1} parent=23 // loop_exit
        _
      %p310 = scmp.lt.s32.totalorder %s12, 1
      %s311 = scalar_select %p310, %s12, 1
      %s312 = smul.addr %s311, 2
      %s313 = smul.addr %s312, 8
      %s314 = scalar_lea.vmem %s1, %s313
      // Predicated region
      $region32: #{tpu_custom_call.1} parent=23 // pred_check
        %p315 = pneg %p56
      $region33: #{tpu_custom_call.1} parent=23 // pred_check_branch
        %317 = sbr.rel (%p315) target = $region35
      $region34: #{tpu_custom_call.1} parent=23 // pred_region
        _
      $region35: #{tpu_custom_call.1} parent=23 // pred_fallthru
        _
    $region24: #{tpu_custom_call.1} parent=5 // pred_fallthru
      _
    %p318 = scmp.le.s32.totalorder 2, %s7
    // Predicated region
    $region36: #{tpu_custom_call.1} parent=5 // pred_check
      %p319 = pneg %p318
    $region37: #{tpu_custom_call.1} parent=5 // pred_check_branch
      %321 = sbr.rel (%p319) target = $region39
    $region38: #{tpu_custom_call.1} parent=5 // pred_region
      %s322 = ssub.s32 %s7, 2
      // Predicated region
      $region40: #{tpu_custom_call.1} parent=38 // pred_check
        %p323 = pneg %p62
      $region41: #{tpu_custom_call.1} parent=38 // pred_check_branch
        %325 = sbr.rel (%p323) target = $region43
      $region42: #{tpu_custom_call.1} parent=38 // pred_region
        %p326 = scmp.lt.s32.totalorder %s13, 1
        %s327 = scalar_select %p326, %s13, 1
        %s328 = smul.addr %s327, 2
        %s329 = smul.addr %s328, 8
        %s330 = scalar_lea.vmem %s1, %s329
      $region43: #{tpu_custom_call.1} parent=38 // pred_fallthru
        _
    $region39: #{tpu_custom_call.1} parent=5 // pred_fallthru
      _
  $region6: #{tpu_custom_call.1} parent=0 // loop_footer
    %s11 = sadd.s32 1, %s7
  $region7: #{tpu_custom_call.1} parent=0 // loop_footer_branch
    %6 = sbr.rel target = $region3
  $region8: #{tpu_custom_call.1} parent=0 // loop_exit
    _

</llo_original>
